<compile_context>
chip_gen: v5e
topology: v5e:2x2
jax: 0.10.0
libtpu: 0.0.40
codegen_flags: <defaults>
</compile_context>

<pallas_src>
import jax
import jax.numpy as jnp
from jax.experimental import pallas as pl
from jax.experimental.pallas import tpu as pltpu

LANES = 128


def _round_up(n, m):
    return ((n + m - 1) // m) * m


def make_conv2d(B, H, W, KH, KW):
    """Returns conv2d(x_bhw, weight, bias) -> (B, OH, OW) for static shapes."""
    OH, OW = H - KH + 1, W - KW + 1
    PACK = max(1, LANES // W)             # images packed along the lane axis
    B_pad = _round_up(B, PACK)
    n_groups = B_pad // PACK
    WPACK = _round_up(PACK * W, LANES)    # lane-dense packed width (== 128 here)

    def corr2d_kernel(w_ref, b_ref, x_ref, o_ref):
        # w_ref: (KH*KW,) f32 SMEM ; b_ref: (1,) f32 SMEM
        # x_ref: (H, WPACK) f32 VMEM   -- PACK images side by side on lanes
        # o_ref: (OH, WPACK) f32 VMEM  -- per-slot cols >= OW are junk, dropped outside
        w = [w_ref[t] for t in range(KH * KW)]            # scalar taps, read once
        acc = jnp.full((OH, WPACK), b_ref[0], jnp.float32)  # bias-initialized
        for di in range(KH):
            rows = x_ref[pl.ds(di, OH), :]                # aligned lane-dense load
            for dj in range(KW):
                if dj == 0:
                    win = rows
                else:
                    # out[:, l] = rows[:, (l + dj) % WPACK]; wrapped lanes only
                    # land in the discarded junk columns of the last slot.
                    win = pltpu.roll(rows, shift=WPACK - dj, axis=1)
                acc = acc + w[di * KW + dj] * win
        o_ref[...] = acc                                  # full-width unmasked store

    call = pl.pallas_call(
        corr2d_kernel,
        out_shape=jax.ShapeDtypeStruct((n_groups, OH, WPACK), jnp.float32),
        grid_spec=pltpu.PrefetchScalarGridSpec(
            num_scalar_prefetch=0,
            grid=(n_groups,),
            in_specs=[
                pl.BlockSpec(memory_space=pltpu.SMEM),                # weight (KH*KW,)
                pl.BlockSpec(memory_space=pltpu.SMEM),                # bias (1,)
                pl.BlockSpec((None, H, WPACK), lambda g: (g, 0, 0)),  # one packed group
            ],
            out_specs=pl.BlockSpec((None, OH, WPACK), lambda g: (g, 0, 0)),
        ),
        compiler_params=pltpu.CompilerParams(
            # Groups are independent -> shard the (tiny) grid across both TCs on v7x.
            dimension_semantics=("parallel",),
        ),
    )

    @jax.jit
    def conv2d(x, weight, bias):
        # x: (B, H, W) f32 -> (B, OH, OW) f32
        xf = x.astype(jnp.float32)
        if B_pad != B:
            xf = jnp.pad(xf, ((0, B_pad - B), (0, 0), (0, 0)))
        # Pack PACK images along the lane axis: (n_groups, H, PACK*W)
        xp = (xf.reshape(n_groups, PACK, H, W)
                .transpose(0, 2, 1, 3)
                .reshape(n_groups, H, PACK * W))
        if WPACK != PACK * W:
            xp = jnp.pad(xp, ((0, 0), (0, 0), (0, WPACK - PACK * W)))
        y_packed = call(weight.reshape(-1).astype(jnp.float32),
                        bias.reshape(-1).astype(jnp.float32), xp)
        # Unpack: slot s occupies lanes [s*W, s*W+W); valid output cols are [0, OW).
        y = (y_packed[:, :, :PACK * W]
             .reshape(n_groups, OH, PACK, W)
             .transpose(0, 2, 1, 3)
             .reshape(B_pad, OH, W))
        return y[:B, :, :OW]

    return conv2d


def ref_corr2d(img, weight, bias):
    """Pure-JAX reference: valid cross-correlation + bias (PyTorch module semantics)."""
    KH, KW = weight.shape
    OH, OW = img.shape[0] - KH + 1, img.shape[1] - KW + 1
    patches = jnp.stack(
        [img[i:i + OH, j:j + OW] for i in range(KH) for j in range(KW)], axis=0
    )
    return jnp.tensordot(weight.reshape(-1), patches, axes=1) + bias[0]


if __name__ == "__main__":
    KH, KW = 3, 3         # kernel_size, as in Conv2D(kernel_size=(3, 3))
    B, H, W = 16, 16, 16  # 16 images -> 2 lane-packed groups -> 2 parallel grid steps

    key = jax.random.PRNGKey(0)
    kw_key, kb_key, kx_key = jax.random.split(key, 3)
    weight = jax.random.normal(kw_key, (KH, KW), dtype=jnp.float32)
    bias = jax.random.normal(kb_key, (1,), dtype=jnp.float32)
    x = jax.random.normal(kx_key, (B, H, W), dtype=jnp.float32)

    conv2d = make_conv2d(B, H, W, KH, KW)
    y = jax.block_until_ready(conv2d(x, weight, bias))

    OH, OW = H - KH + 1, W - KW + 1
    ref = jax.vmap(lambda img: ref_corr2d(img, weight, bias))(x)
    assert y.shape == (B, OH, OW)
    assert jnp.allclose(y, ref, atol=1e-4, rtol=1e-4), "Pallas result mismatch vs reference"

    # Original module semantics (single 2-D image) == batch of one (exercises B-padding).
    conv2d_1 = make_conv2d(1, H, W, KH, KW)
    y1 = jax.block_until_ready(conv2d_1(x[:1], weight, bias))[0]
    assert jnp.allclose(y1, ref_corr2d(x[0], weight, bias), atol=1e-4, rtol=1e-4)

    print("KERNEL_OK")
</pallas_src>

<mosaic_0001>
module attributes {stable_mosaic.version = 11 : i64} {
  func.func @corr2d_kernel(%arg0: i32, %arg1: memref<9xf32, #tpu.memory_space<smem>>, %arg2: memref<1xf32, #tpu.memory_space<smem>>, %arg3: memref<1x16x128xf32, #tpu.memory_space<vmem>>, %arg4: memref<1x14x128xf32, #tpu.memory_space<vmem>>) attributes {dimension_semantics = [#tpu.dimension_semantics<parallel>], iteration_bounds = array<i64: 2>, scalar_prefetch = 0 : i64, scratch_operands = 0 : i64, tpu.core_type = #tpu.core_type<tc>, window_params = [{transform_indices = @transform_0, window_bounds = array<i64: 9>}, {transform_indices = @transform_1, window_bounds = array<i64: 1>}, {transform_indices = @transform_2, window_bounds = array<i64: 1, 16, 128>}, {transform_indices = @transform_3, window_bounds = array<i64: 1, 14, 128>}]} {
    %c0 = arith.constant 0 : index
    %0 = memref.load %arg1[%c0] : memref<9xf32, #tpu.memory_space<smem>>
    %c1 = arith.constant 1 : index
    %1 = memref.load %arg1[%c1] : memref<9xf32, #tpu.memory_space<smem>>
    %c2 = arith.constant 2 : index
    %2 = memref.load %arg1[%c2] : memref<9xf32, #tpu.memory_space<smem>>
    %c3 = arith.constant 3 : index
    %3 = memref.load %arg1[%c3] : memref<9xf32, #tpu.memory_space<smem>>
    %c4 = arith.constant 4 : index
    %4 = memref.load %arg1[%c4] : memref<9xf32, #tpu.memory_space<smem>>
    %c5 = arith.constant 5 : index
    %5 = memref.load %arg1[%c5] : memref<9xf32, #tpu.memory_space<smem>>
    %c6 = arith.constant 6 : index
    %6 = memref.load %arg1[%c6] : memref<9xf32, #tpu.memory_space<smem>>
    %c7 = arith.constant 7 : index
    %7 = memref.load %arg1[%c7] : memref<9xf32, #tpu.memory_space<smem>>
    %c8 = arith.constant 8 : index
    %8 = memref.load %arg1[%c8] : memref<9xf32, #tpu.memory_space<smem>>
    %c0_0 = arith.constant 0 : index
    %9 = memref.load %arg2[%c0_0] : memref<1xf32, #tpu.memory_space<smem>>
    %10 = vector.broadcast %9 : f32 to vector<14x128xf32>
    %c0_1 = arith.constant 0 : index
    %c0_2 = arith.constant 0 : index
    %c0_3 = arith.constant 0 : index
    %11 = vector.load %arg3[%c0_1, %c0_2, %c0_3] : memref<1x16x128xf32, #tpu.memory_space<vmem>>, vector<1x14x128xf32>
    %12 = vector.shape_cast %11 : vector<1x14x128xf32> to vector<14x128xf32>
    %13 = vector.broadcast %0 : f32 to vector<14x128xf32>
    %14 = arith.mulf %13, %12 : vector<14x128xf32>
    %15 = arith.addf %10, %14 : vector<14x128xf32>
    %c127_i32 = arith.constant 127 : i32
    %16 = tpu.dynamic_rotate %12 by %c127_i32 dim 1 : vector<14x128xf32>, i32 -> vector<14x128xf32>
    %17 = vector.broadcast %1 : f32 to vector<14x128xf32>
    %18 = arith.mulf %17, %16 : vector<14x128xf32>
    %19 = arith.addf %15, %18 : vector<14x128xf32>
    %c126_i32 = arith.constant 126 : i32
    %20 = tpu.dynamic_rotate %12 by %c126_i32 dim 1 : vector<14x128xf32>, i32 -> vector<14x128xf32>
    %21 = vector.broadcast %2 : f32 to vector<14x128xf32>
    %22 = arith.mulf %21, %20 : vector<14x128xf32>
    %23 = arith.addf %19, %22 : vector<14x128xf32>
    %c0_4 = arith.constant 0 : index
    %c1_5 = arith.constant 1 : index
    %c0_6 = arith.constant 0 : index
    %24 = vector.load %arg3[%c0_4, %c1_5, %c0_6] : memref<1x16x128xf32, #tpu.memory_space<vmem>>, vector<1x14x128xf32>
    %25 = vector.shape_cast %24 : vector<1x14x128xf32> to vector<14x128xf32>
    %26 = vector.broadcast %3 : f32 to vector<14x128xf32>
    %27 = arith.mulf %26, %25 : vector<14x128xf32>
    %28 = arith.addf %23, %27 : vector<14x128xf32>
    %c127_i32_7 = arith.constant 127 : i32
    %29 = tpu.dynamic_rotate %25 by %c127_i32_7 dim 1 : vector<14x128xf32>, i32 -> vector<14x128xf32>
    %30 = vector.broadcast %4 : f32 to vector<14x128xf32>
    %31 = arith.mulf %30, %29 : vector<14x128xf32>
    %32 = arith.addf %28, %31 : vector<14x128xf32>
    %c126_i32_8 = arith.constant 126 : i32
    %33 = tpu.dynamic_rotate %25 by %c126_i32_8 dim 1 : vector<14x128xf32>, i32 -> vector<14x128xf32>
    %34 = vector.broadcast %5 : f32 to vector<14x128xf32>
    %35 = arith.mulf %34, %33 : vector<14x128xf32>
    %36 = arith.addf %32, %35 : vector<14x128xf32>
    %c0_9 = arith.constant 0 : index
    %c2_10 = arith.constant 2 : index
    %c0_11 = arith.constant 0 : index
    %37 = vector.load %arg3[%c0_9, %c2_10, %c0_11] : memref<1x16x128xf32, #tpu.memory_space<vmem>>, vector<1x14x128xf32>
    %38 = vector.shape_cast %37 : vector<1x14x128xf32> to vector<14x128xf32>
    %39 = vector.broadcast %6 : f32 to vector<14x128xf32>
    %40 = arith.mulf %39, %38 : vector<14x128xf32>
    %41 = arith.addf %36, %40 : vector<14x128xf32>
    %c127_i32_12 = arith.constant 127 : i32
    %42 = tpu.dynamic_rotate %38 by %c127_i32_12 dim 1 : vector<14x128xf32>, i32 -> vector<14x128xf32>
    %43 = vector.broadcast %7 : f32 to vector<14x128xf32>
    %44 = arith.mulf %43, %42 : vector<14x128xf32>
    %45 = arith.addf %41, %44 : vector<14x128xf32>
    %c126_i32_13 = arith.constant 126 : i32
    %46 = tpu.dynamic_rotate %38 by %c126_i32_13 dim 1 : vector<14x128xf32>, i32 -> vector<14x128xf32>
    %47 = vector.broadcast %8 : f32 to vector<14x128xf32>
    %48 = arith.mulf %47, %46 : vector<14x128xf32>
    %49 = arith.addf %45, %48 : vector<14x128xf32>
    %c0_14 = arith.constant 0 : index
    %c0_15 = arith.constant 0 : index
    %c0_16 = arith.constant 0 : index
    %50 = vector.load %arg4[%c0_14, %c0_15, %c0_16] : memref<1x14x128xf32, #tpu.memory_space<vmem>>, vector<1x14x128xf32>
    %51 = vector.shape_cast %50 : vector<1x14x128xf32> to vector<14x128xf32>
    %52 = vector.shape_cast %49 : vector<14x128xf32> to vector<1x14x128xf32>
    tpu.vector_store %arg4[%c0_14, %c0_15, %c0_16], %52 {strides = array<i32>} : memref<1x14x128xf32, #tpu.memory_space<vmem>>, vector<1x14x128xf32>,
    return
  }
  func.func @transform_0(%arg0: i32) -> i32 {
    %c0_i32 = arith.constant 0 : i32
    %c0_i32_0 = arith.constant 0 : i32
    return %c0_i32 : i32
  }
  func.func @transform_1(%arg0: i32) -> i32 {
    %c0_i32 = arith.constant 0 : i32
    %c0_i32_0 = arith.constant 0 : i32
    return %c0_i32 : i32
  }
  func.func @transform_2(%arg0: i32) -> (i32, i32, i32) {
    %c0_i32 = arith.constant 0 : i32
    %c0_i32_0 = arith.constant 0 : i32
    %c0_i32_1 = arith.constant 0 : i32
    return %arg0, %c0_i32, %c0_i32_0 : i32, i32, i32
  }
  func.func @transform_3(%arg0: i32) -> (i32, i32, i32) {
    %c0_i32 = arith.constant 0 : i32
    %c0_i32_0 = arith.constant 0 : i32
    %c0_i32_1 = arith.constant 0 : i32
    return %arg0, %c0_i32, %c0_i32_0 : i32, i32, i32
  }
}

</mosaic_0001>

<llo_original>
// kernel: conv2d.1
$region0: #{conv2d.1}
  #allocation0 [shape = 'u32[]', space=smem, size = 0x4, offset = 0x4, fixed_abs, tag = 'smem constant byte address 0x4 - core index']
  #allocation1 [shape = 'u32[72,128]{1,0:T(1,128)}', space=vmem, size = 0x9000, scoped, tag = 'internal scratch']
  #allocation2 [shape = 'f32[1]{0:T(128)S(6)}', space=smem, size = 0x200, scoped, tag = 'scoped memory for conv2d.1']
  %s0 = inlined_call_operand.vmem [shape: f32[9], index: 0, kind: input, shape index: {}]
  %s1 = inlined_call_operand.<no memory space> [shape: f32[1], index: 1, kind: input, shape index: {}]
  %s2 = inlined_call_operand.vmem [shape: f32[2,16,128], index: 2, kind: input, shape index: {}]
  %s3 = inlined_call_operand.vmem [shape: f32[2,14,128], index: 3, kind: output, shape index: {}]
  %s4 = sld [smem:[#allocation0]]
  $region49: #{conv2d.1} parent=0
    _
  %s6 = ssub.s32 1, %s4
  %s7 = scalar_select 0, %s6, %s4
  %8 = sst [smem:[#allocation2]] %s1
  $region1: #{conv2d.1} parent=0
    #allocation3 [shape = 'u8[512]{0}', space=smem, size = 0x200, scoped, tag = 'input window, operand 0, single buffered']
    #allocation4 [shape = 's32[2]{0}', space=sflag, size = 0x8, scoped, tag = 'scoped memory for conv2d.1']
    %9 = vsyncpa [#allocation4], 0
    loop: start=0, step=1, limit=4
    $region2: #{conv2d.1} parent=1 // loop_pre_header
      _
    $region3: #{conv2d.1} parent=1 // loop_header
      %s11 = sphi 0, %s15
      %p12 = scmp.ge.s32.totalorder %s11, 4
      %s19 = sphi 0, %s19
      %s21 = sphi 0, %s19
      %s22 = sphi 0, %s21
      %s36 = sphi 0, %s22
      %s40 = sphi 0, %s40
      %s42 = sphi 0, %s40
      %s43 = sphi 0, %s42
      %s57 = sphi 0, %s43
      %s63 = sphi 0, %s65
      %s66 = sphi 0, %s63
      %s67 = sphi 0, %s66
      %s83 = sphi 0, %s67
      %s89 = sphi 0, %s91
      %s92 = sphi 0, %s89
      %s93 = sphi 0, %s92
      %s109 = sphi 0, %s93
    $region4: #{conv2d.1} parent=1 // loop_header_branch
      %14 = sbr.rel (%p12) target = $region8
    $region5: #{conv2d.1} parent=1 // loop_body
      %s16 = ssub.s32 %s11, 1
      %s17 = ssub.s32 %s11, 2
      %s18 = sadd.s32 %s11, 1
      %s20 = sadd.s32 %s19, 1
      %p23 = scmp.eq.s32.totalorder %s11, 1
      %p24 = scmp.ne.s32.totalorder %s19, %s21
      %p25 = scmp.eq.s32.totalorder %s11, 0
      %p26 = por %p24, %p25
      %p27 = scmp.ne.s32.totalorder %s19, %s21
      %p28 = scmp.eq.s32.totalorder %s16, 1
      %p29 = por %p27, %p28
      %p30 = scmp.ne.s32.totalorder %s21, %s22
      %p31 = scmp.eq.s32.totalorder %s16, 0
      %p32 = por %p30, %p31
      %p33 = scmp.ne.s32.totalorder %s21, %s22
      %p34 = scmp.eq.s32.totalorder %s17, 1
      %p35 = por %p33, %p34
      %p37 = scmp.ne.s32.totalorder %s22, %s36
      %p38 = scmp.eq.s32.totalorder %s17, 0
      %p39 = por %p37, %p38
      %s41 = sadd.s32 %s40, 1
      %p44 = scmp.eq.s32.totalorder %s11, 1
      %p45 = scmp.ne.s32.totalorder %s40, %s42
      %p46 = scmp.eq.s32.totalorder %s11, 0
      %p47 = por %p45, %p46
      %p48 = scmp.ne.s32.totalorder %s40, %s42
      %p49 = scmp.eq.s32.totalorder %s16, 1
      %p50 = por %p48, %p49
      %p51 = scmp.ne.s32.totalorder %s42, %s43
      %p52 = scmp.eq.s32.totalorder %s16, 0
      %p53 = por %p51, %p52
      %p54 = scmp.ne.s32.totalorder %s42, %s43
      %p55 = scmp.eq.s32.totalorder %s17, 1
      %p56 = por %p54, %p55
      %p58 = scmp.ne.s32.totalorder %s43, %s57
      %p59 = scmp.eq.s32.totalorder %s17, 0
      %p60 = por %p58, %p59
      %s61 = ssub.s32 %s11, %s18
      %p62 = scmp.eq.s32.totalorder %s61, 0
      %s64 = sadd.s32 %s63, 1
      %s65 = scalar_select %p62, %s63, %s64
      %p68 = pneg %p62
      %p69 = scmp.eq.s32.totalorder %s11, 1
      %p70 = por %p68, %p69
      %p71 = scmp.ne.s32.totalorder %s63, %s66
      %p72 = scmp.eq.s32.totalorder %s11, 0
      %p73 = por %p71, %p72
      %p74 = scmp.ne.s32.totalorder %s63, %s66
      %p75 = scmp.eq.s32.totalorder %s16, 1
      %p76 = por %p74, %p75
      %p77 = scmp.ne.s32.totalorder %s66, %s67
      %p78 = scmp.eq.s32.totalorder %s16, 0
      %p79 = por %p77, %p78
      %p80 = scmp.ne.s32.totalorder %s66, %s67
      %p81 = scmp.eq.s32.totalorder %s17, 1
      %p82 = por %p80, %p81
      %p84 = scmp.ne.s32.totalorder %s67, %s83
      %p85 = scmp.eq.s32.totalorder %s17, 0
      %p86 = por %p84, %p85
      %s87 = ssub.s32 %s11, %s18
      %p88 = scmp.eq.s32.totalorder %s87, 0
      %s90 = sadd.s32 %s89, 1
      %s91 = scalar_select %p88, %s89, %s90
      %p94 = pneg %p88
      %p95 = scmp.eq.s32.totalorder %s11, 1
      %p96 = por %p94, %p95
      %p97 = scmp.ne.s32.totalorder %s89, %s92
      %p98 = scmp.eq.s32.totalorder %s11, 0
      %p99 = por %p97, %p98
      %p100 = scmp.ne.s32.totalorder %s89, %s92
      %p101 = scmp.eq.s32.totalorder %s16, 1
      %p102 = por %p100, %p101
      %p103 = scmp.ne.s32.totalorder %s92, %s93
      %p104 = scmp.eq.s32.totalorder %s16, 0
      %p105 = por %p103, %p104
      %p106 = scmp.ne.s32.totalorder %s92, %s93
      %p107 = scmp.eq.s32.totalorder %s17, 1
      %p108 = por %p106, %p107
      %p110 = scmp.ne.s32.totalorder %s93, %s109
      %p111 = scmp.eq.s32.totalorder %s17, 0
      %p112 = por %p110, %p111
      %p113 = scmp.le.s32.totalorder 1, %s11
      %p114 = scmp.lt.s32.totalorder %s11, 3
      %p115 = pnand %p113, %p114
      %p116 = pneg %p115
      // Predicated region
      $region9: #{conv2d.1} parent=5 // pred_check
        _
      $region10: #{conv2d.1} parent=5 // pred_check_branch
        %118 = sbr.rel (%p115) target = $region12
      $region11: #{conv2d.1} parent=5 // pred_region
        %s119 = ssub.s32 %s11, 1
        // Predicated region
        $region13: #{conv2d.1} parent=11 // pred_check
          %p120 = pneg %p32
        $region14: #{conv2d.1} parent=11 // pred_check_branch
          %122 = sbr.rel (%p120) target = $region16
        $region15: #{conv2d.1} parent=11 // pred_region
          %124 = vsyncadd [#allocation4], 0
          %s126 = sshll.u32 %s0, 4
          %s127 = int_to_ptr.vmem [resolvable:$true] %s126
          %129 = dma.vmem_to_smem %s127, 16, [#allocation3], [#allocation4]
        $region16: #{conv2d.1} parent=11 // pred_fallthru
          _
        // Predicated region
        $region17: #{conv2d.1} parent=11 // pred_check
          %p130 = pneg %p53
        $region18: #{conv2d.1} parent=11 // pred_check_branch
          %132 = sbr.rel (%p130) target = $region20
        $region19: #{conv2d.1} parent=11 // pred_region
          _
        $region20: #{conv2d.1} parent=11 // pred_fallthru
          _
      $region12: #{conv2d.1} parent=5 // pred_fallthru
        _
      %p133 = scmp.lt.s32.totalorder %s11, 2
      // Predicated region
      $region21: #{conv2d.1} parent=5 // pred_check
        %p134 = pneg %p133
      $region22: #{conv2d.1} parent=5 // pred_check_branch
        %136 = sbr.rel (%p134) target = $region24
      $region23: #{conv2d.1} parent=5 // pred_region
        // Predicated region
        $region25: #{conv2d.1} parent=23 // pred_check
          %p137 = pneg %p73
        $region26: #{conv2d.1} parent=23 // pred_check_branch
          %139 = sbr.rel (%p137) target = $region28
        $region27: #{conv2d.1} parent=23 // pred_region
          %p140 = scmp.lt.s32.totalorder %s11, 1
          %s141 = scalar_select %p140, %s11, 1
          %s142 = smul.addr %s141, 2
          %s143 = smul.addr %s142, 8
          %s144 = scalar_lea.vmem %s2, %s143
        $region28: #{conv2d.1} parent=23 // pred_fallthru
          _
      $region24: #{conv2d.1} parent=5 // pred_fallthru
        _
      %p145 = scmp.le.s32.totalorder 1, %s11
      %p146 = scmp.lt.s32.totalorder %s11, 3
      %p147 = pnand %p145, %p146
      %p148 = pneg %p147
      // Predicated region
      $region29: #{conv2d.1} parent=5 // pred_check
        _
      $region30: #{conv2d.1} parent=5 // pred_check_branch
        %150 = sbr.rel (%p147) target = $region32
      $region31: #{conv2d.1} parent=5 // pred_region
        %s151 = ssub.s32 %s11, 1
        // Predicated region
        $region33: #{conv2d.1} parent=31 // pred_check
          %p152 = pneg %p32
        $region34: #{conv2d.1} parent=31 // pred_check_branch
          %154 = sbr.rel (%p152) target = $region36
        $region35: #{conv2d.1} parent=31 // pred_region
          %156 = dma.done [#allocation4], 16
        $region36: #{conv2d.1} parent=31 // pred_fallthru
          _
        %157 = sfence
        %p158 = pneg %p32
        %p159 = pneg %p29
        %p160 = pneg %p53
        %p161 = pneg %p50
        %p162 = scmp.lt.s32.totalorder %s16, 1
        %s163 = scalar_select %p162, %s16, 1
        %s164 = smul.addr %s163, 2
        %s165 = smul.addr %s164, 8
        %s166 = scalar_lea.vmem %s2, %s165
        %p167 = pneg %p79
        %p168 = pneg %p76
        %p169 = pneg %p105
        %p170 = pneg %p102
        %p171 = scmp.lt.s32.totalorder %s16, 1
        %s172 = scalar_select %p171, %s16, 1
        %s173 = smul.addr %s172, 2
        %s174 = smul.addr %s173, 8
        %s175 = scalar_lea.vmem %s3, %s174
        %p176 = scmp.lt.s32.totalorder %s16, 1
        %s177 = scalar_select %p176, %s16, 1
        %s178 = smul.addr %s177, 2
        %s179 = smul.addr %s178, 8
        %s180 = scalar_lea.vmem %s2, %s179
        %p181 = scmp.lt.s32.totalorder %s16, 1
        %s182 = scalar_select %p181, %s16, 1
        %s183 = smul.addr %s182, 2
        %s184 = smul.addr %s183, 8
        %s185 = scalar_lea.vmem %s3, %s184
        %s186 = sld [smem:[#allocation3]]
        %s187 = sld [smem:[#allocation3 + $0x1]]
        %s188 = sld [smem:[#allocation3 + $0x2]]
        %s189 = sld [smem:[#allocation3 + $0x3]]
        %s190 = sld [smem:[#allocation3 + $0x4]]
        %s191 = sld [smem:[#allocation3 + $0x5]]
        %s192 = sld [smem:[#allocation3 + $0x6]]
        %s193 = sld [smem:[#allocation3 + $0x7]]
        %s194 = sld [smem:[#allocation3 + $0x8]]
        %s195 = sld [smem:[#allocation2]]
        %v196 = vstv %s195
        %v197 = vld [vmem:[%s180] sm:$0xff]
        %v198 = vld [vmem:[%s180 + $0x8] sm:$0x3f]
        %v199 = vstv %s186
        %v200 = vmul.f32 %v199, %v197
        %v201 = vmul.f32 %v199, %v198
        %v202 = vadd.f32 %v196, %v200
        %v203 = vadd.f32 %v196, %v201
        %204 = vrot.lane.b32.xlu0 %v197, 127
        %v205 = vpop.permute.xlu0 %204
        %206 = vrot.lane.b32.xlu0 %v198, 127
        %v207 = vpop.permute.xlu0 %206
        %v208 = vstv %s187
        %v209 = vmul.f32 %v208, %v205
        %v210 = vmul.f32 %v208, %v207
        %v211 = vadd.f32 %v202, %v209
        %v212 = vadd.f32 %v203, %v210
        %213 = vrot.lane.b32.xlu0 %v197, 126
        %v214 = vpop.permute.xlu0 %213
        %215 = vrot.lane.b32.xlu0 %v198, 126
        %v216 = vpop.permute.xlu0 %215
        %v217 = vstv %s188
        %v218 = vmul.f32 %v217, %v214
        %v219 = vmul.f32 %v217, %v216
        %v220 = vadd.f32 %v211, %v218
        %v221 = vadd.f32 %v212, %v219
        %v222 = vld [vmem:[%s180 + $0x1] sm:$0xff]
        %v223 = vld [vmem:[%s180 + $0x9] sm:$0x3f]
        %v224 = vstv %s189
        %v225 = vmul.f32 %v224, %v222
        %v226 = vmul.f32 %v224, %v223
        %v227 = vadd.f32 %v220, %v225
        %v228 = vadd.f32 %v221, %v226
        %229 = vrot.lane.b32.xlu0 %v222, 127
        %v230 = vpop.permute.xlu0 %229
        %231 = vrot.lane.b32.xlu0 %v223, 127
        %v232 = vpop.permute.xlu0 %231
        %v233 = vstv %s190
        %v234 = vmul.f32 %v233, %v230
        %v235 = vmul.f32 %v233, %v232
        %v236 = vadd.f32 %v227, %v234
        %v237 = vadd.f32 %v228, %v235
        %238 = vrot.lane.b32.xlu0 %v222, 126
        %v239 = vpop.permute.xlu0 %238
        %240 = vrot.lane.b32.xlu0 %v223, 126
        %v241 = vpop.permute.xlu0 %240
        %v242 = vstv %s191
        %v243 = vmul.f32 %v242, %v239
        %v244 = vmul.f32 %v242, %v241
        %v245 = vadd.f32 %v236, %v243
        %v246 = vadd.f32 %v237, %v244
        %v247 = vld [vmem:[%s180 + $0x2] sm:$0xff]
        %v248 = vld [vmem:[%s180 + $0xa] sm:$0x3f]
        %v249 = vstv %s192
        %v250 = vmul.f32 %v249, %v247
        %v251 = vmul.f32 %v249, %v248
        %v252 = vadd.f32 %v245, %v250
        %v253 = vadd.f32 %v246, %v251
        %254 = vrot.lane.b32.xlu0 %v247, 127
        %v255 = vpop.permute.xlu0 %254
        %256 = vrot.lane.b32.xlu0 %v248, 127
        %v257 = vpop.permute.xlu0 %256
        %v258 = vstv %s193
        %v259 = vmul.f32 %v258, %v255
        %v260 = vmul.f32 %v258, %v257
        %v261 = vadd.f32 %v252, %v259
        %v262 = vadd.f32 %v253, %v260
        %263 = vrot.lane.b32.xlu0 %v247, 126
        %v264 = vpop.permute.xlu0 %263
        %265 = vrot.lane.b32.xlu0 %v248, 126
        %v266 = vpop.permute.xlu0 %265
        %v267 = vstv %s194
        %v268 = vmul.f32 %v267, %v264
        %v269 = vmul.f32 %v267, %v266
        %v270 = vadd.f32 %v261, %v268
        %v271 = vadd.f32 %v262, %v269
        %272 = vst [vmem:[%s185] sm:$0xff] %v270
        %273 = vst [vmem:[%s185 + $0x8] sm:$0x3f] %v271
        %p274 = scmp.lt.s32.totalorder %s16, 1
        %s275 = scalar_select %p274, %s16, 1
        %s276 = smul.addr %s275, 2
        %s277 = smul.addr %s276, 8
        %s278 = scalar_lea.vmem %s3, %s277
        // Predicated region
        $region37: #{conv2d.1} parent=31 // pred_check
          %p279 = pneg %p102
        $region38: #{conv2d.1} parent=31 // pred_check_branch
          %281 = sbr.rel (%p279) target = $region40
        $region39: #{conv2d.1} parent=31 // pred_region
          _
        $region40: #{conv2d.1} parent=31 // pred_fallthru
          _
      $region32: #{conv2d.1} parent=5 // pred_fallthru
        _
      %p282 = scmp.le.s32.totalorder 2, %s11
      // Predicated region
      $region41: #{conv2d.1} parent=5 // pred_check
        %p283 = pneg %p282
      $region42: #{conv2d.1} parent=5 // pred_check_branch
        %285 = sbr.rel (%p283) target = $region44
      $region43: #{conv2d.1} parent=5 // pred_region
        %s286 = ssub.s32 %s11, 2
        // Predicated region
        $region45: #{conv2d.1} parent=43 // pred_check
          %p287 = pneg %p108
        $region46: #{conv2d.1} parent=43 // pred_check_branch
          %289 = sbr.rel (%p287) target = $region48
        $region47: #{conv2d.1} parent=43 // pred_region
          %p290 = scmp.lt.s32.totalorder %s17, 1
          %s291 = scalar_select %p290, %s17, 1
          %s292 = smul.addr %s291, 2
          %s293 = smul.addr %s292, 8
          %s294 = scalar_lea.vmem %s3, %s293
        $region48: #{conv2d.1} parent=43 // pred_fallthru
          _
      $region44: #{conv2d.1} parent=5 // pred_fallthru
        _
    $region6: #{conv2d.1} parent=1 // loop_footer
      %s15 = sadd.s32 1, %s11
    $region7: #{conv2d.1} parent=1 // loop_footer_branch
      %10 = sbr.rel target = $region3
    $region8: #{conv2d.1} parent=1 // loop_exit
      _
    %295 = vsyncpa [#allocation4], 1
    %s296 = scalar_lea.sflag [#allocation4], 1
    %297 = vsyncpa %s296, 1

</llo_original>
